<compile_context>
chip_gen: v7x
topology: tpu7x:2x2x1
jax: 0.10.0
libtpu: 0.0.40
codegen_flags: <defaults>
</compile_context>

<pallas_src>
import jax
import jax.numpy as jnp
from jax import lax
from jax.experimental import pallas as pl
from jax.experimental.pallas import tpu as pltpu


def _make_gcb_kernel(nb, l_valid, l_pad):
    needs_mask = (l_pad != l_valid)

    def kernel(x_ref, wenc_ref, w1_ref, w2_ref, out_ref):
        # x_ref : (NB, C, Lp)   NB batch elements
        # wenc  : (1, C)        encoder 1x1x1 conv weight (C -> 1)
        # w1    : (Hd, C)       bottleneck expand weight
        # w2    : (C, Hd)       bottleneck project weight
        wenc = wenc_ref[...].astype(jnp.float32)
        w1 = w1_ref[...].astype(jnp.float32)
        w2 = w2_ref[...].astype(jnp.float32)

        for b in range(nb):                              # NB is small & static
            xb = x_ref[b].astype(jnp.float32)            # (C, Lp)

            # encoder as MXU matmul: (1, C) @ (C, Lp) -> keys (1, Lp)
            keys = jnp.dot(wenc, xb, preferred_element_type=jnp.float32)
            if needs_mask:
                lane = lax.broadcasted_iota(jnp.int32, keys.shape, 1)
                keys = jnp.where(lane < l_valid, keys, -1e30)

            # softmax over the L spatio-temporal positions (lane axis)
            m = jnp.max(keys, axis=-1, keepdims=True)
            e = jnp.exp(keys - m)
            denom = jnp.sum(e, axis=-1, keepdims=True)
            attn = e * pl.reciprocal(denom, approx=True)          # (1, Lp)

            # context as MXU matmul contracting L: (C, Lp) . (1, Lp)^T -> (C, 1)
            ctx = lax.dot_general(
                xb, attn, (((1,), (1,)), ((), ())),
                preferred_element_type=jnp.float32)

            # bottleneck MLP: 1x1x1 conv -> HSwish -> 1x1x1 conv
            h = jnp.dot(w1, ctx, preferred_element_type=jnp.float32)   # (Hd, 1)
            h = h * jnp.clip(h + 3.0, 0.0, 6.0) * (1.0 / 6.0)          # HSwish
            y = jnp.dot(w2, h, preferred_element_type=jnp.float32)     # (C, 1)

            # residual add, y broadcast over all L positions (lane-dense store)
            out_ref[b] = (xb + y).astype(out_ref.dtype)

    return kernel


def _pick_batch_block(n, c, l_pad, itemsize):
    """Largest NB dividing N s.t. the block fits a modest VMEM budget while the
    grid keeps >= 2 steps (so both v7x TensorCores get work)."""
    block_budget = 6 * 1024 * 1024   # 4x (dbl-buffered in+out) stays < 24 MiB
    best = 1
    for nb in range(1, n + 1):
        if n % nb:
            continue
        if n >= 2 and (n // nb) < 2:
            continue
        if nb * c * l_pad * itemsize <= block_budget:
            best = nb
    return best


@jax.jit
def global_context_block(x, w_enc, w1, w2):
    """x: (N, C, T, H, W); returns same shape.  Bias-free 1x1x1 convs."""
    N, C, T, H, W = x.shape
    L = T * H * W
    Hd = w1.shape[0]
    Lp = ((L + 127) // 128) * 128            # lane-dense last dim

    x2 = x.reshape(N, C, L)
    if Lp != L:
        x2 = jnp.pad(x2, ((0, 0), (0, 0), (0, Lp - L)))
    wenc_row = w_enc.reshape(1, C)

    itemsize = jnp.dtype(x.dtype).itemsize
    NB = _pick_batch_block(N, C, Lp, itemsize)
    grid = N // NB

    block_bytes = NB * C * Lp * itemsize
    weight_bytes = (C + 2 * C * Hd) * 4
    vmem_limit = int(min(max(4 * block_bytes + 2 * weight_bytes + (2 << 20),
                             16 * 1024 * 1024),
                         48 * 1024 * 1024))

    cost = pl.CostEstimate(
        flops=int(N * (5 * C * Lp + 4 * C * Hd + 4 * Lp)),
        transcendentals=int(N * Lp),
        bytes_accessed=int(2 * N * C * Lp * itemsize + weight_bytes),
    )

    out = pl.pallas_call(
        _make_gcb_kernel(NB, L, Lp),
        out_shape=jax.ShapeDtypeStruct((N, C, Lp), x.dtype),
        grid_spec=pltpu.PrefetchScalarGridSpec(
            num_scalar_prefetch=0,
            grid=(grid,),
            in_specs=[
                pl.BlockSpec((NB, C, Lp), lambda n: (n, 0, 0)),
                pl.BlockSpec((1, C), lambda n: (0, 0)),
                pl.BlockSpec((Hd, C), lambda n: (0, 0)),
                pl.BlockSpec((C, Hd), lambda n: (0, 0)),
            ],
            out_specs=pl.BlockSpec((NB, C, Lp), lambda n: (n, 0, 0)),
        ),
        compiler_params=pltpu.CompilerParams(
            dimension_semantics=("parallel",),
            vmem_limit_bytes=vmem_limit,
        ),
        input_output_aliases={0: 0},   # output overwrites the padded x slab
        cost_estimate=cost,
    )(x2, wenc_row, w1, w2)

    if Lp != L:
        out = out[:, :, :L]
    return out.reshape(N, C, T, H, W)


def _reference(x, w_enc, w1, w2):
    # pure-JAX reference mirroring the PyTorch forward
    N, C, T, H, W = x.shape
    L = T * H * W
    xf = x.reshape(N, C, L).astype(jnp.float32)
    keys = jnp.einsum("c,ncl->nl", w_enc, xf)                 # encoder
    attn = jax.nn.softmax(keys, axis=-1)                      # softmax over THW
    ctx = jnp.einsum("ncl,nl->nc", xf, attn)                  # context
    h = ctx @ w1.T
    h = h * jnp.clip(h + 3.0, 0.0, 6.0) / 6.0                 # HSwish
    y = h @ w2.T
    return (xf.reshape(N, C, T, H, W) + y[:, :, None, None, None]).astype(x.dtype)


if __name__ == "__main__":
    def _run_case(n, c, t, h, w, internal_factor=3.0):
        hd = int(internal_factor * c)
        key = jax.random.PRNGKey(0)
        kx, ke, k1, k2 = jax.random.split(key, 4)
        x = jax.random.normal(kx, (n, c, t, h, w), dtype=jnp.float32)
        # deterministic synthetic 1x1x1 conv weights (bias-free, norm='none')
        w_enc = jax.random.normal(ke, (c,), dtype=jnp.float32) * 0.1
        w1 = jax.random.normal(k1, (hd, c), dtype=jnp.float32) * 0.1
        w2 = jax.random.normal(k2, (c, hd), dtype=jnp.float32) * 0.1

        ref = _reference(x, w_enc, w1, w2)          # reference first (paranoia
                                                    # vs. output aliasing)
        out = global_context_block(x, w_enc, w1, w2)
        jax.block_until_ready(out)

        assert out.shape == x.shape
        assert jnp.allclose(out, ref, atol=2e-3, rtol=2e-3), (
            f"mismatch vs JAX reference for shape {(n, c, t, h, w)}")

    # lane-dense case: L = 4*8*8 = 256 (multiple of 128, no padding)
    _run_case(2, 4, 4, 8, 8)
    # ragged case: L = 4*7*7 = 196 -> padded to 256, softmax mask exercised
    _run_case(2, 4, 4, 7, 7)

    print("KERNEL_OK")
</pallas_src>

<mosaic_0001>
module attributes {stable_mosaic.version = 11 : i64} {
  func.func @kernel(%arg0: i32, %arg1: memref<1x4x256xf32, #tpu.memory_space<vmem>>, %arg2: memref<1x4xf32, #tpu.memory_space<vmem>>, %arg3: memref<12x4xf32, #tpu.memory_space<vmem>>, %arg4: memref<4x12xf32, #tpu.memory_space<vmem>>, %arg5: memref<1x4x256xf32, #tpu.memory_space<vmem>>) attributes {dimension_semantics = [#tpu.dimension_semantics<parallel>], iteration_bounds = array<i64: 2>, scalar_prefetch = 0 : i64, scratch_operands = 0 : i64, tpu.core_type = #tpu.core_type<tc>, window_params = [{transform_indices = @transform_0, window_bounds = array<i64: 1, 4, 256>}, {pipeline_mode = #tpu.pipeline_mode<synchronous>, transform_indices = @transform_1, window_bounds = array<i64: 1, 4>}, {pipeline_mode = #tpu.pipeline_mode<synchronous>, transform_indices = @transform_2, window_bounds = array<i64: 12, 4>}, {pipeline_mode = #tpu.pipeline_mode<synchronous>, transform_indices = @transform_3, window_bounds = array<i64: 4, 12>}, {transform_indices = @transform_4, window_bounds = array<i64: 1, 4, 256>}]} {
    %c0 = arith.constant 0 : index
    %c0_0 = arith.constant 0 : index
    %0 = vector.load %arg2[%c0, %c0_0] : memref<1x4xf32, #tpu.memory_space<vmem>>, vector<1x4xf32>
    %c0_1 = arith.constant 0 : index
    %c0_2 = arith.constant 0 : index
    %1 = vector.load %arg3[%c0_1, %c0_2] : memref<12x4xf32, #tpu.memory_space<vmem>>, vector<12x4xf32>
    %c0_3 = arith.constant 0 : index
    %c0_4 = arith.constant 0 : index
    %2 = vector.load %arg4[%c0_3, %c0_4] : memref<4x12xf32, #tpu.memory_space<vmem>>, vector<4x12xf32>
    %c0_5 = arith.constant 0 : index
    %c0_6 = arith.constant 0 : index
    %c0_7 = arith.constant 0 : index
    %3 = vector.load %arg1[%c0_5, %c0_6, %c0_7] : memref<1x4x256xf32, #tpu.memory_space<vmem>>, vector<1x4x256xf32>
    %4 = vector.shape_cast %3 : vector<1x4x256xf32> to vector<4x256xf32>
    %cst = arith.constant dense<0.000000e+00> : vector<1x256xf32>
    %5 = tpu.matmul %0, %4, %cst {dimension_numbers = #tpu.dot_dimension_numbers<[1], [0], [0], [1], [0, 0, 1, 1], [], []>} : vector<1x4xf32>, vector<4x256xf32>, vector<1x256xf32> -> vector<1x256xf32>
    %cst_8 = arith.constant dense<0xFF800000> : vector<1xf32>
    %6 = vector.multi_reduction <maximumf>, %5, %cst_8 [1] : vector<1x256xf32> to vector<1xf32>
    %7 = vector.shape_cast %6 : vector<1xf32> to vector<1x1xf32>
    %8 = vector.broadcast %7 : vector<1x1xf32> to vector<1x256xf32>
    %9 = arith.subf %5, %8 : vector<1x256xf32>
    %10 = math.exp %9 : vector<1x256xf32>
    %cst_9 = arith.constant dense<0.000000e+00> : vector<1xf32>
    %11 = vector.multi_reduction <add>, %10, %cst_9 [1] : vector<1x256xf32> to vector<1xf32>
    %12 = vector.shape_cast %11 : vector<1xf32> to vector<1x1xf32>
    %13 = tpu.reciprocal %12 {approx = true} : vector<1x1xf32> -> vector<1x1xf32>
    %14 = vector.broadcast %13 : vector<1x1xf32> to vector<1x256xf32>
    %15 = arith.mulf %10, %14 : vector<1x256xf32>
    %cst_10 = arith.constant dense<0.000000e+00> : vector<4x1xf32>
    %16 = tpu.matmul %4, %15, %cst_10 {dimension_numbers = #tpu.dot_dimension_numbers<[1], [1], [0], [0], [0, 0, 1, 0], [], []>} : vector<4x256xf32>, vector<1x256xf32>, vector<4x1xf32> -> vector<4x1xf32>
    %cst_11 = arith.constant dense<0.000000e+00> : vector<12x1xf32>
    %17 = tpu.matmul %1, %16, %cst_11 {dimension_numbers = #tpu.dot_dimension_numbers<[1], [0], [0], [1], [0, 0, 1, 1], [], []>} : vector<12x4xf32>, vector<4x1xf32>, vector<12x1xf32> -> vector<12x1xf32>
    %cst_12 = arith.constant 3.000000e+00 : f32
    %18 = vector.broadcast %cst_12 : f32 to vector<12x1xf32>
    %19 = arith.addf %17, %18 : vector<12x1xf32>
    %cst_13 = arith.constant 0.000000e+00 : f32
    %cst_14 = arith.constant 6.000000e+00 : f32
    %20 = vector.broadcast %cst_13 : f32 to vector<12x1xf32>
    %21 = arith.maximumf %20, %19 : vector<12x1xf32>
    %22 = vector.broadcast %cst_14 : f32 to vector<12x1xf32>
    %23 = arith.minimumf %22, %21 : vector<12x1xf32>
    %24 = arith.mulf %17, %23 : vector<12x1xf32>
    %cst_15 = arith.constant 0.166666672 : f32
    %25 = vector.broadcast %cst_15 : f32 to vector<12x1xf32>
    %26 = arith.mulf %24, %25 : vector<12x1xf32>
    %cst_16 = arith.constant dense<0.000000e+00> : vector<4x1xf32>
    %27 = tpu.matmul %2, %26, %cst_16 {dimension_numbers = #tpu.dot_dimension_numbers<[1], [0], [0], [1], [0, 0, 1, 1], [], []>} : vector<4x12xf32>, vector<12x1xf32>, vector<4x1xf32> -> vector<4x1xf32>
    %28 = vector.broadcast %27 : vector<4x1xf32> to vector<4x256xf32>
    %29 = arith.addf %4, %28 : vector<4x256xf32>
    %c0_17 = arith.constant 0 : index
    %c0_18 = arith.constant 0 : index
    %c0_19 = arith.constant 0 : index
    %30 = vector.load %arg5[%c0_17, %c0_18, %c0_19] : memref<1x4x256xf32, #tpu.memory_space<vmem>>, vector<1x4x256xf32>
    %31 = vector.shape_cast %30 : vector<1x4x256xf32> to vector<4x256xf32>
    %32 = vector.shape_cast %29 : vector<4x256xf32> to vector<1x4x256xf32>
    tpu.vector_store %arg5[%c0_17, %c0_18, %c0_19], %32 {strides = array<i32>} : memref<1x4x256xf32, #tpu.memory_space<vmem>>, vector<1x4x256xf32>,
    return
  }
  func.func @transform_0(%arg0: i32) -> (i32, i32, i32) {
    %c0_i32 = arith.constant 0 : i32
    %c0_i32_0 = arith.constant 0 : i32
    %c0_i32_1 = arith.constant 0 : i32
    return %arg0, %c0_i32, %c0_i32_0 : i32, i32, i32
  }
  func.func @transform_1(%arg0: i32) -> (i32, i32) {
    %c0_i32 = arith.constant 0 : i32
    %c0_i32_0 = arith.constant 0 : i32
    %c0_i32_1 = arith.constant 0 : i32
    return %c0_i32, %c0_i32_0 : i32, i32
  }
  func.func @transform_2(%arg0: i32) -> (i32, i32) {
    %c0_i32 = arith.constant 0 : i32
    %c0_i32_0 = arith.constant 0 : i32
    %c0_i32_1 = arith.constant 0 : i32
    return %c0_i32, %c0_i32_0 : i32, i32
  }
  func.func @transform_3(%arg0: i32) -> (i32, i32) {
    %c0_i32 = arith.constant 0 : i32
    %c0_i32_0 = arith.constant 0 : i32
    %c0_i32_1 = arith.constant 0 : i32
    return %c0_i32, %c0_i32_0 : i32, i32
  }
  func.func @transform_4(%arg0: i32) -> (i32, i32, i32) {
    %c0_i32 = arith.constant 0 : i32
    %c0_i32_0 = arith.constant 0 : i32
    %c0_i32_1 = arith.constant 0 : i32
    return %arg0, %c0_i32, %c0_i32_0 : i32, i32, i32
  }
}

</mosaic_0001>

<llo_original>
// kernel: global_context_block.1
$region0: #{global_context_block.1}
  #allocation0 [shape = 'u32[]', space=smem, size = 0x4, offset = 0x4, fixed_abs, tag = 'smem constant byte address 0x4 - core index']
  #allocation1 [shape = 'u32[144,128]{1,0:T(1,128)}', space=vmem, size = 0x12000, scoped, tag = 'internal scratch']
  %s0 = inlined_call_operand.vmem [shape: f32[2,4,256], index: 0, kind: input, shape index: {}, may-alias: {0,4}]
  %s1 = inlined_call_operand.vmem [shape: f32[1,4], index: 1, kind: input, shape index: {}]
  %s2 = inlined_call_operand.vmem [shape: f32[12,4], index: 2, kind: input, shape index: {}]
  %s3 = inlined_call_operand.vmem [shape: f32[4,12], index: 3, kind: input, shape index: {}]
  %s4 = inlined_call_operand.vmem [shape: f32[2,4,256], index: 4, kind: output, shape index: {}, may-alias: {0,4}]
  %s5 = sld [smem:[#allocation0]]
  $region49: #{global_context_block.1} parent=0
    _
  %s7 = ssub.s32 1, %s5
  %s8 = scalar_select 0, %s7, %s5
  loop: start=0, step=1, limit=4
  $region2: #{global_context_block.1} parent=0 // loop_pre_header
    _
  $region3: #{global_context_block.1} parent=0 // loop_header
    %s10 = sphi 0, %s14
    %p11 = scmp.ge.s32.totalorder %s10, 4
    %s20 = sphi 0, %s22
    %s23 = sphi 0, %s20
    %s24 = sphi 0, %s23
    %s40 = sphi 0, %s24
    %s44 = sphi 0, %s44
    %s46 = sphi 0, %s44
    %s47 = sphi 0, %s46
    %s61 = sphi 0, %s47
    %s65 = sphi 0, %s65
    %s67 = sphi 0, %s65
    %s68 = sphi 0, %s67
    %s82 = sphi 0, %s68
    %s86 = sphi 0, %s86
    %s88 = sphi 0, %s86
    %s89 = sphi 0, %s88
    %s103 = sphi 0, %s89
    %s109 = sphi 0, %s111
    %s112 = sphi 0, %s109
    %s113 = sphi 0, %s112
    %s129 = sphi 0, %s113
  $region4: #{global_context_block.1} parent=0 // loop_header_branch
    %13 = sbr.rel (%p11) target = $region8
  $region5: #{global_context_block.1} parent=0 // loop_body
    %s15 = ssub.s32 %s10, 1
    %s16 = ssub.s32 %s10, 2
    %s17 = sadd.s32 %s10, 1
    %s18 = ssub.s32 %s10, %s17
    %p19 = scmp.eq.s32.totalorder %s18, 0
    %s21 = sadd.s32 %s20, 1
    %s22 = scalar_select %p19, %s20, %s21
    %p25 = pneg %p19
    %p26 = scmp.eq.s32.totalorder %s10, 1
    %p27 = por %p25, %p26
    %p28 = scmp.ne.s32.totalorder %s20, %s23
    %p29 = scmp.eq.s32.totalorder %s10, 0
    %p30 = por %p28, %p29
    %p31 = scmp.ne.s32.totalorder %s20, %s23
    %p32 = scmp.eq.s32.totalorder %s15, 1
    %p33 = por %p31, %p32
    %p34 = scmp.ne.s32.totalorder %s23, %s24
    %p35 = scmp.eq.s32.totalorder %s15, 0
    %p36 = por %p34, %p35
    %p37 = scmp.ne.s32.totalorder %s23, %s24
    %p38 = scmp.eq.s32.totalorder %s16, 1
    %p39 = por %p37, %p38
    %p41 = scmp.ne.s32.totalorder %s24, %s40
    %p42 = scmp.eq.s32.totalorder %s16, 0
    %p43 = por %p41, %p42
    %s45 = sadd.s32 %s44, 1
    %p48 = scmp.eq.s32.totalorder %s10, 1
    %p49 = scmp.ne.s32.totalorder %s44, %s46
    %p50 = scmp.eq.s32.totalorder %s10, 0
    %p51 = por %p49, %p50
    %p52 = scmp.ne.s32.totalorder %s44, %s46
    %p53 = scmp.eq.s32.totalorder %s15, 1
    %p54 = por %p52, %p53
    %p55 = scmp.ne.s32.totalorder %s46, %s47
    %p56 = scmp.eq.s32.totalorder %s15, 0
    %p57 = por %p55, %p56
    %p58 = scmp.ne.s32.totalorder %s46, %s47
    %p59 = scmp.eq.s32.totalorder %s16, 1
    %p60 = por %p58, %p59
    %p62 = scmp.ne.s32.totalorder %s47, %s61
    %p63 = scmp.eq.s32.totalorder %s16, 0
    %p64 = por %p62, %p63
    %s66 = sadd.s32 %s65, 1
    %p69 = scmp.eq.s32.totalorder %s10, 1
    %p70 = scmp.ne.s32.totalorder %s65, %s67
    %p71 = scmp.eq.s32.totalorder %s10, 0
    %p72 = por %p70, %p71
    %p73 = scmp.ne.s32.totalorder %s65, %s67
    %p74 = scmp.eq.s32.totalorder %s15, 1
    %p75 = por %p73, %p74
    %p76 = scmp.ne.s32.totalorder %s67, %s68
    %p77 = scmp.eq.s32.totalorder %s15, 0
    %p78 = por %p76, %p77
    %p79 = scmp.ne.s32.totalorder %s67, %s68
    %p80 = scmp.eq.s32.totalorder %s16, 1
    %p81 = por %p79, %p80
    %p83 = scmp.ne.s32.totalorder %s68, %s82
    %p84 = scmp.eq.s32.totalorder %s16, 0
    %p85 = por %p83, %p84
    %s87 = sadd.s32 %s86, 1
    %p90 = scmp.eq.s32.totalorder %s10, 1
    %p91 = scmp.ne.s32.totalorder %s86, %s88
    %p92 = scmp.eq.s32.totalorder %s10, 0
    %p93 = por %p91, %p92
    %p94 = scmp.ne.s32.totalorder %s86, %s88
    %p95 = scmp.eq.s32.totalorder %s15, 1
    %p96 = por %p94, %p95
    %p97 = scmp.ne.s32.totalorder %s88, %s89
    %p98 = scmp.eq.s32.totalorder %s15, 0
    %p99 = por %p97, %p98
    %p100 = scmp.ne.s32.totalorder %s88, %s89
    %p101 = scmp.eq.s32.totalorder %s16, 1
    %p102 = por %p100, %p101
    %p104 = scmp.ne.s32.totalorder %s89, %s103
    %p105 = scmp.eq.s32.totalorder %s16, 0
    %p106 = por %p104, %p105
    %s107 = ssub.s32 %s10, %s17
    %p108 = scmp.eq.s32.totalorder %s107, 0
    %s110 = sadd.s32 %s109, 1
    %s111 = scalar_select %p108, %s109, %s110
    %p114 = pneg %p108
    %p115 = scmp.eq.s32.totalorder %s10, 1
    %p116 = por %p114, %p115
    %p117 = scmp.ne.s32.totalorder %s109, %s112
    %p118 = scmp.eq.s32.totalorder %s10, 0
    %p119 = por %p117, %p118
    %p120 = scmp.ne.s32.totalorder %s109, %s112
    %p121 = scmp.eq.s32.totalorder %s15, 1
    %p122 = por %p120, %p121
    %p123 = scmp.ne.s32.totalorder %s112, %s113
    %p124 = scmp.eq.s32.totalorder %s15, 0
    %p125 = por %p123, %p124
    %p126 = scmp.ne.s32.totalorder %s112, %s113
    %p127 = scmp.eq.s32.totalorder %s16, 1
    %p128 = por %p126, %p127
    %p130 = scmp.ne.s32.totalorder %s113, %s129
    %p131 = scmp.eq.s32.totalorder %s16, 0
    %p132 = por %p130, %p131
    %p133 = scmp.le.s32.totalorder 1, %s10
    %p134 = scmp.lt.s32.totalorder %s10, 3
    %p135 = pnand %p133, %p134
    %p136 = pneg %p135
    // Predicated region
    $region9: #{global_context_block.1} parent=5 // pred_check
      _
    $region10: #{global_context_block.1} parent=5 // pred_check_branch
      %138 = sbr.rel (%p135) target = $region12
    $region11: #{global_context_block.1} parent=5 // pred_region
      %s139 = ssub.s32 %s10, 1
      // Predicated region
      $region13: #{global_context_block.1} parent=11 // pred_check
        %p140 = pneg %p57
      $region14: #{global_context_block.1} parent=11 // pred_check_branch
        %142 = sbr.rel (%p140) target = $region16
      $region15: #{global_context_block.1} parent=11 // pred_region
        _
      $region16: #{global_context_block.1} parent=11 // pred_fallthru
        _
      // Predicated region
      $region17: #{global_context_block.1} parent=11 // pred_check
        %p143 = pneg %p78
      $region18: #{global_context_block.1} parent=11 // pred_check_branch
        %145 = sbr.rel (%p143) target = $region20
      $region19: #{global_context_block.1} parent=11 // pred_region
        _
      $region20: #{global_context_block.1} parent=11 // pred_fallthru
        _
      // Predicated region
      $region21: #{global_context_block.1} parent=11 // pred_check
        %p146 = pneg %p99
      $region22: #{global_context_block.1} parent=11 // pred_check_branch
        %148 = sbr.rel (%p146) target = $region24
      $region23: #{global_context_block.1} parent=11 // pred_region
        _
      $region24: #{global_context_block.1} parent=11 // pred_fallthru
        _
    $region12: #{global_context_block.1} parent=5 // pred_fallthru
      _
    %p149 = scmp.lt.s32.totalorder %s10, 2
    // Predicated region
    $region25: #{global_context_block.1} parent=5 // pred_check
      %p150 = pneg %p149
    $region26: #{global_context_block.1} parent=5 // pred_check_branch
      %152 = sbr.rel (%p150) target = $region28
    $region27: #{global_context_block.1} parent=5 // pred_region
      // Predicated region
      $region29: #{global_context_block.1} parent=27 // pred_check
        %p153 = pneg %p30
      $region30: #{global_context_block.1} parent=27 // pred_check_branch
        %155 = sbr.rel (%p153) target = $region32
      $region31: #{global_context_block.1} parent=27 // pred_region
        %p156 = scmp.lt.s32.totalorder %s10, 1
        %s157 = scalar_select %p156, %s10, 1
        %s158 = smul.addr %s157, 2
        %s159 = smul.addr %s158, 4
        %s160 = scalar_lea.vmem %s0, %s159
      $region32: #{global_context_block.1} parent=27 // pred_fallthru
        _
    $region28: #{global_context_block.1} parent=5 // pred_fallthru
      _
    %p161 = scmp.le.s32.totalorder 1, %s10
    %p162 = scmp.lt.s32.totalorder %s10, 3
    %p163 = pnand %p161, %p162
    %p164 = pneg %p163
    // Predicated region
    $region33: #{global_context_block.1} parent=5 // pred_check
      _
    $region34: #{global_context_block.1} parent=5 // pred_check_branch
      %166 = sbr.rel (%p163) target = $region36
    $region35: #{global_context_block.1} parent=5 // pred_region
      %s167 = ssub.s32 %s10, 1
      %p168 = scmp.lt.s32.totalorder %s15, 1
      %s169 = scalar_select %p168, %s15, 1
      %s170 = smul.addr %s169, 2
      %s171 = smul.addr %s170, 4
      %s172 = scalar_lea.vmem %s0, %s171
      %p173 = pneg %p36
      %p174 = pneg %p33
      %p175 = pneg %p57
      %p176 = pneg %p54
      %p177 = pneg %p78
      %p178 = pneg %p75
      %p179 = pneg %p99
      %p180 = pneg %p96
      %p181 = pneg %p125
      %p182 = pneg %p122
      %p183 = scmp.lt.s32.totalorder %s15, 1
      %s184 = scalar_select %p183, %s15, 1
      %s185 = smul.addr %s184, 2
      %s186 = smul.addr %s185, 4
      %s187 = scalar_lea.vmem %s4, %s186
      %p188 = scmp.lt.s32.totalorder %s15, 1
      %s189 = scalar_select %p188, %s15, 1
      %s190 = smul.addr %s189, 2
      %s191 = smul.addr %s190, 4
      %s192 = scalar_lea.vmem %s0, %s191
      %p193 = scmp.lt.s32.totalorder %s15, 1
      %s194 = scalar_select %p193, %s15, 1
      %s195 = smul.addr %s194, 2
      %s196 = smul.addr %s195, 4
      %s197 = scalar_lea.vmem %s4, %s196
      %v198 = vld [vmem:[%s1] sm:$0x1]
      %v199 = vld [vmem:[%s2] sm:$0xff]
      %v200 = vld [vmem:[%s2 + $0x8] sm:$0xf]
      %v201 = vld [vmem:[%s3] sm:$0xf]
      %v202 = vld [vmem:[%s192] sm:$0xff]
      %v204 = vcombine.high %v202, %v202
      %vm205 = vcmask 31744
      %v207 = vsel %vm205, %v198, 0
      %vm209 = vcmask 1043456
      %v210 = vsel %vm209, %v202, 0
      %v212 = vsel %vm209, %v204, 0
      %214 = vmatprep.subr.mxu0 %v212
      %215 = vmatpush1.msra.mxu0 %v210
      %216 = vmatprep.subr.mxu0 0.0
      %217 = vmatpush1.msra.mxu0 0.0
      %218 = vmatprep.subr.mxu0 0.0
      %219 = vmatpush1.msra.mxu0 0.0
      %220 = vmatprep.subr.mxu0 0.0
      %221 = vmatpush1.msra.mxu0 0.0
      %222 = vmatprep.subr.mxu0 0.0
      %223 = vmatpush1.msra.mxu0 0.0
      %224 = vmatprep.subr.mxu0 0.0
      %225 = vmatpush1.msra.mxu0 0.0
      %226 = vmatprep.subr.mxu0 0.0
      %227 = vmatpush1.msra.mxu0 0.0
      %228 = vmatprep.subr.mxu0 0.0
      %229 = vmatpush1.msra.mxu0 0.0
      %230 = vmatprep.subr.mxu0 0.0
      %231 = vmatpush1.msra.mxu0 0.0
      %232 = vmatprep.subr.mxu0 0.0
      %233 = vmatpush1.msra.mxu0 0.0
      %234 = vmatprep.subr.mxu0 0.0
      %235 = vmatpush1.msra.mxu0 0.0
      %236 = vmatprep.subr.mxu0 0.0
      %237 = vmatpush1.msra.mxu0 0.0
      %238 = vmatprep.subr.mxu0 0.0
      %239 = vmatpush1.msra.mxu0 0.0
      %240 = vmatprep.subr.mxu0 0.0
      %241 = vmatpush1.msra.mxu0 0.0
      %242 = vmatprep.subr.mxu0 0.0
      %243 = vmatpush1.msra.mxu0 0.0
      %244 = vmatprep.subr.mxu0 0.0
      %245 = vmatpush1.msra.mxu0 0.0
      %246 = vmatprep.subr.mxu0 0.0
      %247 = vmatpush1.msra.mxu0 0.0
      %248 = vmatprep.subr.mxu0 0.0
      %249 = vmatpush1.msra.mxu0 0.0
      %250 = vmatprep.subr.mxu0 0.0
      %251 = vmatpush1.msra.mxu0 0.0
      %252 = vmatprep.subr.mxu0 0.0
      %253 = vmatpush1.msra.mxu0 0.0
      %254 = vmatprep.subr.mxu0 0.0
      %255 = vmatpush1.msra.mxu0 0.0
      %256 = vmatprep.subr.mxu0 0.0
      %257 = vmatpush1.msra.mxu0 0.0
      %258 = vmatprep.subr.mxu0 0.0
      %259 = vmatpush1.msra.mxu0 0.0
      %260 = vmatprep.subr.mxu0 0.0
      %261 = vmatpush1.msra.mxu0 0.0
      %262 = vmatprep.subr.mxu0 0.0
      %263 = vmatpush1.msra.mxu0 0.0
      %264 = vmatprep.subr.mxu0 0.0
      %265 = vmatpush1.msra.mxu0 0.0
      %266 = vmatprep.subr.mxu0 0.0
      %267 = vmatpush1.msra.mxu0 0.0
      %268 = vmatprep.subr.mxu0 0.0
      %269 = vmatpush1.msra.mxu0 0.0
      %270 = vmatprep.subr.mxu0 0.0
      %271 = vmatpush1.msra.mxu0 0.0
      %272 = vmatprep.subr.mxu0 0.0
      %273 = vmatpush1.msra.mxu0 0.0
      %274 = vmatprep.subr.mxu0 0.0
      %275 = vmatpush1.msra.mxu0 0.0
      %276 = vmatprep.subr.mxu0 0.0
      %277 = vmatpush1.msra.mxu0 0.0
      %278 = vmatprep.mubr.f32.mxu0 0.0
      %279 = vmatmul.mubr.f32.gmra.mrb[0].mxu0 %v207
      %v280 = vpop.f32.mrb[0].mxu0
      %v281 = vadd.f32 0.0, %v280
      %v282 = vpop.f32.mrb[0].mxu0
      %v283 = vadd.f32 0.0, %v282
      %284 = vdwg.mxu0
      %vm285 = vcmask 1040384
      %v286 = vsel %vm285, %v281, -inf
      %v287 = vsel %vm285, %v283, -inf
      %v288 = vmax.f32 %v286, %v287
      %289 = vmax.xlane.f32.xlu0 %v288
      %v290 = vpop.xlane.xlu0 %289
      %v291 = vsub.f32 %v281, %v290
      %v292 = vsub.f32 %v283, %v290
      %v293 = vmul.f32 %v291, 1.442695
      %v294 = vpow.pop %v293
      %v295 = vmul.f32 %v292, 1.442695
      %v296 = vpow.pop %v295
      %v297 = vsel %vm285, %v294, 0.0
      %v298 = vsel %vm285, %v296, 0.0
      %v299 = vadd.f32 %v297, %v298
      %300 = vadd.xlane.f32.xlu0 %v299
      %v301 = vpop.xlane.xlu0 %300
      %v302 = vrcp.pop %v301
      %v303 = vmul.f32 %v294, %v302
      %v304 = vmul.f32 %v296, %v302
      %v305 = vlaneseq
      %v306 = vshrl.u32 %v305, 7
      %v307 = vsub.s32 0, %v306
      %v308 = vrot.slane %v303, %v307
      %v309 = vlaneseq
      %v310 = vshrl.u32 %v309, 7
      %v311 = vsub.s32 0, %v310
      %v312 = vrot.slane %v304, %v311
      %v315 = vcombine.low %v308, %v312
      %v317 = vmul.f32 %v202, %v315
      %v319 = vcombine.high %v317, %v317
      %v321 = vsel %vm209, %v317, 0.0
      %v322 = vsel %vm209, %v319, 0.0
      %v323 = vadd.f32 %v321, %v322
      %324 = vadd.xlane.f32.xlu0 %v323
      %v325 = vpop.xlane.xlu0 %324
      %v327 = vsel %vm205, %v199, 0
      %v330 = vsel %vm205, %v200, 0
      %v333 = vsel %vm209, %v325, 0
      %335 = vmatprep.subr.mxu0 0.0
      %336 = vmatpush1.msra.mxu0 %v333
      %337 = vmatprep.subr.mxu0 0.0
      %338 = vmatpush1.msra.mxu0 0.0
      %339 = vmatprep.subr.mxu0 0.0
      %340 = vmatpush1.msra.mxu0 0.0
      %341 = vmatprep.subr.mxu0 0.0
      %342 = vmatpush1.msra.mxu0 0.0
      %343 = vmatprep.subr.mxu0 0.0
      %344 = vmatpush1.msra.mxu0 0.0
      %345 = vmatprep.subr.mxu0 0.0
      %346 = vmatpush1.msra.mxu0 0.0
      %347 = vmatprep.subr.mxu0 0.0
      %348 = vmatpush1.msra.mxu0 0.0
      %349 = vmatprep.subr.mxu0 0.0
      %350 = vmatpush1.msra.mxu0 0.0
      %351 = vmatprep.subr.mxu0 0.0
      %352 = vmatpush1.msra.mxu0 0.0
      %353 = vmatprep.subr.mxu0 0.0
      %354 = vmatpush1.msra.mxu0 0.0
      %355 = vmatprep.subr.mxu0 0.0
      %356 = vmatpush1.msra.mxu0 0.0
      %357 = vmatprep.subr.mxu0 0.0
      %358 = vmatpush1.msra.mxu0 0.0
      %359 = vmatprep.subr.mxu0 0.0
      %360 = vmatpush1.msra.mxu0 0.0
      %361 = vmatprep.subr.mxu0 0.0
      %362 = vmatpush1.msra.mxu0 0.0
      %363 = vmatprep.subr.mxu0 0.0
      %364 = vmatpush1.msra.mxu0 0.0
      %365 = vmatprep.subr.mxu0 0.0
      %366 = vmatpush1.msra.mxu0 0.0
      %367 = vmatprep.subr.mxu0 0.0
      %368 = vmatpush1.msra.mxu0 0.0
      %369 = vmatprep.subr.mxu0 0.0
      %370 = vmatpush1.msra.mxu0 0.0
      %371 = vmatprep.subr.mxu0 0.0
      %372 = vmatpush1.msra.mxu0 0.0
      %373 = vmatprep.subr.mxu0 0.0
      %374 = vmatpush1.msra.mxu0 0.0
      %375 = vmatprep.subr.mxu0 0.0
      %376 = vmatpush1.msra.mxu0 0.0
      %377 = vmatprep.subr.mxu0 0.0
      %378 = vmatpush1.msra.mxu0 0.0
      %379 = vmatprep.subr.mxu0 0.0
      %380 = vmatpush1.msra.mxu0 0.0
      %381 = vmatprep.subr.mxu0 0.0
      %382 = vmatpush1.msra.mxu0 0.0
      %383 = vmatprep.subr.mxu0 0.0
      %384 = vmatpush1.msra.mxu0 0.0
      %385 = vmatprep.subr.mxu0 0.0
      %386 = vmatpush1.msra.mxu0 0.0
      %387 = vmatprep.subr.mxu0 0.0
      %388 = vmatpush1.msra.mxu0 0.0
      %389 = vmatprep.subr.mxu0 0.0
      %390 = vmatpush1.msra.mxu0 0.0
      %391 = vmatprep.subr.mxu0 0.0
      %392 = vmatpush1.msra.mxu0 0.0
      %393 = vmatprep.subr.mxu0 0.0
      %394 = vmatpush1.msra.mxu0 0.0
      %395 = vmatprep.subr.mxu0 0.0
      %396 = vmatpush1.msra.mxu0 0.0
      %397 = vmatprep.subr.mxu0 0.0
      %398 = vmatpush1.msra.mxu0 0.0
      %399 = vmatprep.mubr.f32.mxu0 0.0
      %400 = vmatmul.mubr.f32.gmra.mrb[0].mxu0 %v327
      %v401 = vpop.f32.mrb[0].mxu0
      %v402 = vadd.f32 0.0, %v401
      %v403 = vpop.f32.mrb[0].mxu0
      %404 = vmatprep.mubr.f32.mxu0 0.0
      %405 = vmatmul.mubr.f32.gmra.mrb[0].mxu0 %v330
      %v406 = vpop.f32.mrb[0].mxu0
      %v407 = vadd.f32 0.0, %v406
      %v408 = vpop.f32.mrb[0].mxu0
      %409 = vdwg.mxu0
      %v410 = vadd.f32 %v402, 3.0
      %v411 = vadd.f32 %v407, 3.0
      %v412 = vmax.f32 %v410, 0.0
      %v413 = vmax.f32 %v411, 0.0
      %v414 = vmin.f32 %v412, 6.0
      %v415 = vmin.f32 %v413, 6.0
      %v416 = vmul.f32 %v402, %v414
      %v417 = vmul.f32 %v407, %v415
      %v418 = vmul.f32 %v416, 0.16666667
      %v419 = vmul.f32 %v417, 0.16666667
      %vm420 = vcmask 97280
      %v422 = vsel %vm420, %v201, 0
      %v425 = vsel %vm209, %v419, 0
      %427 = vmatprep.subr.mxu0 0.0
      %428 = vmatpush1.msra.mxu0 %v418
      %429 = vmatprep.subr.mxu0 0.0
      %430 = vmatpush1.msra.mxu0 %v425
      %431 = vmatprep.subr.mxu0 0.0
      %432 = vmatpush1.msra.mxu0 0.0
      %433 = vmatprep.subr.mxu0 0.0
      %434 = vmatpush1.msra.mxu0 0.0
      %435 = vmatprep.subr.mxu0 0.0
      %436 = vmatpush1.msra.mxu0 0.0
      %437 = vmatprep.subr.mxu0 0.0
      %438 = vmatpush1.msra.mxu0 0.0
      %439 = vmatprep.subr.mxu0 0.0
      %440 = vmatpush1.msra.mxu0 0.0
      %441 = vmatprep.subr.mxu0 0.0
      %442 = vmatpush1.msra.mxu0 0.0
      %443 = vmatprep.subr.mxu0 0.0
      %444 = vmatpush1.msra.mxu0 0.0
      %445 = vmatprep.subr.mxu0 0.0
      %446 = vmatpush1.msra.mxu0 0.0
      %447 = vmatprep.subr.mxu0 0.0
      %448 = vmatpush1.msra.mxu0 0.0
      %449 = vmatprep.subr.mxu0 0.0
      %450 = vmatpush1.msra.mxu0 0.0
      %451 = vmatprep.subr.mxu0 0.0
      %452 = vmatpush1.msra.mxu0 0.0
      %453 = vmatprep.subr.mxu0 0.0
      %454 = vmatpush1.msra.mxu0 0.0
      %455 = vmatprep.subr.mxu0 0.0
      %456 = vmatpush1.msra.mxu0 0.0
      %457 = vmatprep.subr.mxu0 0.0
      %458 = vmatpush1.msra.mxu0 0.0
      %459 = vmatprep.subr.mxu0 0.0
      %460 = vmatpush1.msra.mxu0 0.0
      %461 = vmatprep.subr.mxu0 0.0
      %462 = vmatpush1.msra.mxu0 0.0
      %463 = vmatprep.subr.mxu0 0.0
      %464 = vmatpush1.msra.mxu0 0.0
      %465 = vmatprep.subr.mxu0 0.0
      %466 = vmatpush1.msra.mxu0 0.0
      %467 = vmatprep.subr.mxu0 0.0
      %468 = vmatpush1.msra.mxu0 0.0
      %469 = vmatprep.subr.mxu0 0.0
      %470 = vmatpush1.msra.mxu0 0.0
      %471 = vmatprep.subr.mxu0 0.0
      %472 = vmatpush1.msra.mxu0 0.0
      %473 = vmatprep.subr.mxu0 0.0
      %474 = vmatpush1.msra.mxu0 0.0
      %475 = vmatprep.subr.mxu0 0.0
      %476 = vmatpush1.msra.mxu0 0.0
      %477 = vmatprep.subr.mxu0 0.0
      %478 = vmatpush1.msra.mxu0 0.0
      %479 = vmatprep.subr.mxu0 0.0
      %480 = vmatpush1.msra.mxu0 0.0
      %481 = vmatprep.subr.mxu0 0.0
      %482 = vmatpush1.msra.mxu0 0.0
      %483 = vmatprep.subr.mxu0 0.0
      %484 = vmatpush1.msra.mxu0 0.0
      %485 = vmatprep.subr.mxu0 0.0
      %486 = vmatpush1.msra.mxu0 0.0
      %487 = vmatprep.subr.mxu0 0.0
      %488 = vmatpush1.msra.mxu0 0.0
      %489 = vmatprep.subr.mxu0 0.0
      %490 = vmatpush1.msra.mxu0 0.0
      %491 = vmatprep.mubr.f32.mxu0 0.0
      %492 = vmatmul.mubr.f32.gmra.mrb[0].mxu0 %v422
      %v493 = vpop.f32.mrb[0].mxu0
      %v494 = vadd.f32 0.0, %v493
      %v495 = vpop.f32.mrb[0].mxu0
      %496 = vdwg.mxu0
      %498 = vset.pattern.permute.xlu0 0
      %499 = vperm.xlu0 %498, %v494
      %v500 = vpop.permute.xlu0 %499
      %v502 = vunpack.c.l.s4 839922192
      %v503 = vunpack.c.0.s8 %v502
      %v504 = vlaneseq
      %v505 = vshrl.u32 %v504, 7
      %v506 = vsub.s32 %v503, %v505
      %v507 = vrot.slane %v500, %v506
      %v509 = vadd.f32 %v202, %v507
      %510 = vst [vmem:[%s197] sm:$0xff] %v509
      %p511 = scmp.lt.s32.totalorder %s15, 1
      %s512 = scalar_select %p511, %s15, 1
      %s513 = smul.addr %s512, 2
      %s514 = smul.addr %s513, 4
      %s515 = scalar_lea.vmem %s4, %s514
      // Predicated region
      $region37: #{global_context_block.1} parent=35 // pred_check
        %p516 = pneg %p122
      $region38: #{global_context_block.1} parent=35 // pred_check_branch
        %518 = sbr.rel (%p516) target = $region40
      $region39: #{global_context_block.1} parent=35 // pred_region
        _
      $region40: #{global_context_block.1} parent=35 // pred_fallthru
        _
    $region36: #{global_context_block.1} parent=5 // pred_fallthru
      _
    %p519 = scmp.le.s32.totalorder 2, %s10
    // Predicated region
    $region41: #{global_context_block.1} parent=5 // pred_check
      %p520 = pneg %p519
    $region42: #{global_context_block.1} parent=5 // pred_check_branch
      %522 = sbr.rel (%p520) target = $region44
    $region43: #{global_context_block.1} parent=5 // pred_region
      %s523 = ssub.s32 %s10, 2
      // Predicated region
      $region45: #{global_context_block.1} parent=43 // pred_check
        %p524 = pneg %p128
      $region46: #{global_context_block.1} parent=43 // pred_check_branch
        %526 = sbr.rel (%p524) target = $region48
      $region47: #{global_context_block.1} parent=43 // pred_region
        %p527 = scmp.lt.s32.totalorder %s16, 1
        %s528 = scalar_select %p527, %s16, 1
        %s529 = smul.addr %s528, 2
        %s530 = smul.addr %s529, 4
        %s531 = scalar_lea.vmem %s4, %s530
      $region48: #{global_context_block.1} parent=43 // pred_fallthru
        _
    $region44: #{global_context_block.1} parent=5 // pred_fallthru
      _
  $region6: #{global_context_block.1} parent=0 // loop_footer
    %s14 = sadd.s32 1, %s10
  $region7: #{global_context_block.1} parent=0 // loop_footer_branch
    %9 = sbr.rel target = $region3
  $region8: #{global_context_block.1} parent=0 // loop_exit
    _

</llo_original>
